<compile_context>
chip_gen: v6e
topology: v6e:2x2x1
jax: 0.10.0
libtpu: 0.0.40
codegen_flags: <defaults>
</compile_context>

<pallas_src>
import numpy as np
import jax
import jax.numpy as jnp
from jax.experimental import pallas as pl
from jax.experimental.pallas import tpu as pltpu


def make_actor_kernel(repr_dim, state_dim, hidden_dim, act_dim, n_layers,
                      log_std_min, log_std_max, act_limit):
    """Builds the fused kernel body. Slab layout is fixed by the wrapper:

    w_slab index:  0 -> trunk_w (repr,state), 1..n_layers -> pi_trunk w's,
                   n_layers+1 -> fused head w (hidden, 2*A)
    b_slab row:    0 trunk_b, 1 ln_gamma, 2 ln_beta,
                   3..3+n_layers-1 pi_trunk b's, 3+n_layers fused head b
    """
    A = act_dim

    def kernel(state_ref, noise_ref, w_ref, b_ref, out_ref):
        x = state_ref[...].astype(jnp.float32)

        # ---- trunk: Linear -> LayerNorm -> tanh ----
        w0 = w_ref[0][:repr_dim, :state_dim]
        b0 = b_ref[0:1, :state_dim]
        gam = b_ref[1:2, :state_dim]
        bet = b_ref[2:3, :state_dim]
        h = jnp.dot(x, w0, preferred_element_type=jnp.float32) + b0
        mean = jnp.mean(h, axis=-1, keepdims=True)
        var = jnp.mean((h - mean) ** 2, axis=-1, keepdims=True)
        h = (h - mean) * jax.lax.rsqrt(var + 1e-5)
        h = jnp.tanh(h * gam + bet)

        # ---- pi_trunk: n_layers x [Linear, ReLU] ----
        din = state_dim
        for li in range(n_layers):
            w = w_ref[1 + li][:din, :hidden_dim]
            b = b_ref[3 + li:4 + li, :hidden_dim]
            h = jnp.maximum(
                jnp.dot(h, w, preferred_element_type=jnp.float32) + b, 0.0)
            din = hidden_dim

        # ---- fused heads: one matmul producing [mu | log_std_raw] ----
        hw = w_ref[1 + n_layers][:hidden_dim, :2 * A]
        hb = b_ref[3 + n_layers:4 + n_layers, :2 * A]
        heads = jnp.dot(h, hw, preferred_element_type=jnp.float32) + hb
        mu = heads[:, :A]
        log_std = jnp.tanh(heads[:, A:2 * A])
        log_std = log_std_min + 0.5 * (log_std_max - log_std_min) * (log_std + 1.0)

        noise = noise_ref[...].astype(jnp.float32)
        pi = mu + noise * jnp.exp(log_std)

        mu_t = jnp.tanh(mu)
        pi_t = jnp.tanh(pi)

        # single fused cross-lane reduction:
        #   gaussian_logprob + tanh-squash correction in one jnp.sum
        per_elem = (-0.5 * noise * noise - log_std
                    - jnp.log(jnp.maximum(1.0 - pi_t * pi_t, 0.0) + 1e-6))
        log_pi = (jnp.sum(per_elem, axis=-1, keepdims=True)
                  - 0.5 * np.log(2.0 * np.pi) * A)

        # _output / _reprocess
        def _output(p):
            p = act_limit * p
            p = jnp.where(p == 1.0, p - 1e-10, p)
            p = jnp.where(p == -1.0, p + 1e-10, p)
            return p

        # single merged output buffer: [mu_scaled | pi_scaled | log_std | log_pi]
        out_ref[:, 0:A] = _output(mu_t)
        out_ref[:, A:2 * A] = _output(pi_t)
        out_ref[:, 2 * A:3 * A] = log_std
        out_ref[:, 3 * A:3 * A + 1] = log_pi

    return kernel


def _pack_params(params):
    """Pack all parameters into one weight slab and one bias/gain slab."""
    n_layers = len(params["pi_trunk"])
    # fuse the two heads (mu | log_std) along the output axis
    head_w = jnp.concatenate([params["mean_w"], params["logstd_w"]], axis=1)
    head_b = jnp.concatenate([params["mean_b"], params["logstd_b"]], axis=1)

    w_list = ([params["trunk_w"]]
              + [w for (w, _) in params["pi_trunk"]]
              + [head_w])
    max_in = max(int(w.shape[0]) for w in w_list)
    max_out = max(int(w.shape[1]) for w in w_list)
    w_slab = jnp.stack([
        jnp.pad(w, ((0, max_in - w.shape[0]), (0, max_out - w.shape[1])))
        for w in w_list])                                   # (n_mats, max_in, max_out)

    b_list = ([params["trunk_b"], params["ln_g"], params["ln_b"]]
              + [b for (_, b) in params["pi_trunk"]]
              + [head_b])
    bw = max(int(b.shape[1]) for b in b_list)
    b_slab = jnp.concatenate([
        jnp.pad(b, ((0, 0), (0, bw - b.shape[1]))) for b in b_list], axis=0)
    return w_slab, b_slab, n_layers


def sg_mlp_actor_forward(state, noise, params, *, log_std_min, log_std_max, act_limit):
    """Wrapper: packs parameters into 2 slabs, runs the fused Pallas kernel, splits outputs."""
    repr_dim = int(params["trunk_w"].shape[0])
    state_dim = int(params["trunk_w"].shape[1])
    hidden_dim = int(params["pi_trunk"][0][0].shape[1])
    A = int(params["mean_w"].shape[1])
    B = int(state.shape[0])

    w_slab, b_slab, n_layers = _pack_params(params)
    inputs = [state, noise, w_slab, b_slab]

    out_width = 3 * A + 1
    out_shape = jax.ShapeDtypeStruct((B, out_width), jnp.float32)

    # cost estimate (advisory): matmul flops, transcendentals, bytes moved
    din_list = [state_dim] + [hidden_dim] * (n_layers - 1)
    matmul_terms = (repr_dim * state_dim
                    + sum(d * hidden_dim for d in din_list)
                    + hidden_dim * 2 * A)
    flops = int(2 * B * matmul_terms)
    transcendentals = int(B * (state_dim + 5 * A + 1))
    bytes_accessed = int(sum(int(np.prod(a.shape)) * 4 for a in inputs)
                         + B * out_width * 4)

    vmem_spec = pl.BlockSpec(memory_space=pltpu.MemorySpace.VMEM)
    kernel = make_actor_kernel(repr_dim, state_dim, hidden_dim, A, n_layers,
                               log_std_min, log_std_max, act_limit)

    packed = pl.pallas_call(
        kernel,
        out_shape=out_shape,
        in_specs=[vmem_spec] * len(inputs),
        out_specs=vmem_spec,
        cost_estimate=pl.CostEstimate(flops=flops,
                                      transcendentals=transcendentals,
                                      bytes_accessed=bytes_accessed),
    )(*inputs)

    mu_s = packed[:, 0:A]
    pi_s = packed[:, A:2 * A]
    log_std = packed[:, 2 * A:3 * A]
    log_pi = packed[:, 3 * A:3 * A + 1]
    return mu_s, pi_s, log_pi, log_std


def reference_forward(state, noise, params, *, log_std_min, log_std_max, act_limit):
    """Pure-JAX reference mirroring the PyTorch module, for correctness check."""
    h = state @ params["trunk_w"] + params["trunk_b"]
    mean = jnp.mean(h, axis=-1, keepdims=True)
    var = jnp.mean((h - mean) ** 2, axis=-1, keepdims=True)
    h = (h - mean) / jnp.sqrt(var + 1e-5) * params["ln_g"] + params["ln_b"]
    h = jnp.tanh(h)
    for (w, b) in params["pi_trunk"]:
        h = jnp.maximum(h @ w + b, 0.0)
    mu = h @ params["mean_w"] + params["mean_b"]
    log_std = jnp.tanh(h @ params["logstd_w"] + params["logstd_b"])
    log_std = log_std_min + 0.5 * (log_std_max - log_std_min) * (log_std + 1.0)
    std = jnp.exp(log_std)
    pi = mu + noise * std
    A = mu.shape[-1]
    log_pi = jnp.sum(-0.5 * noise ** 2 - log_std, axis=-1, keepdims=True) \
        - 0.5 * np.log(2.0 * np.pi) * A
    mu_t, pi_t = jnp.tanh(mu), jnp.tanh(pi)
    log_pi = log_pi - jnp.sum(jnp.log(jnp.maximum(1.0 - pi_t ** 2, 0.0) + 1e-6),
                              axis=-1, keepdims=True)

    def _output(p):
        p = act_limit * p
        p = jnp.where(p == 1.0, p - 1e-10, p)
        p = jnp.where(p == -1.0, p + 1e-10, p)
        return p

    return _output(mu_t), _output(pi_t), log_pi, log_std


def init_params(key, repr_dim, state_dim, hidden_dim, act_dim, n_layers):
    """Deterministic synthetic parameter init (weights stored as (in, out))."""
    keys = jax.random.split(key, 4 + 2 * n_layers + 4)
    ki = iter(keys)

    def lin(k, din, dout):
        w = jax.random.normal(k, (din, dout), jnp.float32) / np.sqrt(din)
        b = jnp.zeros((1, dout), jnp.float32)
        return w, b

    params = {}
    params["trunk_w"], params["trunk_b"] = lin(next(ki), repr_dim, state_dim)
    params["ln_g"] = jnp.ones((1, state_dim), jnp.float32)
    params["ln_b"] = jnp.zeros((1, state_dim), jnp.float32)
    pi_trunk = []
    din = state_dim
    for _ in range(n_layers):
        w, b = lin(next(ki), din, hidden_dim)
        pi_trunk.append((w, b))
        din = hidden_dim
    params["pi_trunk"] = pi_trunk
    params["mean_w"], params["mean_b"] = lin(next(ki), hidden_dim, act_dim)
    params["logstd_w"], params["logstd_b"] = lin(next(ki), hidden_dim, act_dim)
    return params


if __name__ == "__main__":
    # Module config (small, consistent with SGMLPActor.__init__)
    B = 8
    repr_dim = 32            # repr_dim (trunk input)
    state_dim = 32           # encoder_feature_dim
    hidden_dim = 32
    act_dim = 4              # action_shape[0]
    l = 2                    # hidden depth -> pi_trunk has l Linear+ReLU layers
    log_std_min, log_std_max = -10.0, 2.0
    act_limit = 1.0

    key = jax.random.PRNGKey(0)
    k_state, k_noise, k_params = jax.random.split(key, 3)

    state = jax.random.normal(k_state, (B, repr_dim), jnp.float32)
    noise = jax.random.normal(k_noise, (B, act_dim), jnp.float32)  # torch.randn_like(mu)
    params = init_params(k_params, repr_dim, state_dim, hidden_dim, act_dim, l)

    outs = sg_mlp_actor_forward(
        state, noise, params,
        log_std_min=log_std_min, log_std_max=log_std_max, act_limit=act_limit)
    outs = jax.block_until_ready(outs)

    refs = reference_forward(
        state, noise, params,
        log_std_min=log_std_min, log_std_max=log_std_max, act_limit=act_limit)

    for o, r in zip(outs, refs):
        np.testing.assert_allclose(np.asarray(o), np.asarray(r), rtol=1e-5, atol=1e-5)

    print("KERNEL_OK")
</pallas_src>

<mosaic_0001>
module attributes {stable_mosaic.version = 11 : i64} {
  func.func @kernel(%arg0: memref<8x32xf32, #tpu.memory_space<vmem>>, %arg1: memref<8x4xf32, #tpu.memory_space<vmem>>, %arg2: memref<4x32x32xf32, #tpu.memory_space<vmem>>, %arg3: memref<6x32xf32, #tpu.memory_space<vmem>>, %arg4: memref<8x13xf32, #tpu.memory_space<vmem>>) attributes {dimension_semantics = [], scalar_prefetch = 0 : i64, scratch_operands = 0 : i64, tpu.core_type = #tpu.core_type<tc>} {
    %c0 = arith.constant 0 : index
    %c0_0 = arith.constant 0 : index
    %0 = vector.load %arg0[%c0, %c0_0] : memref<8x32xf32, #tpu.memory_space<vmem>>, vector<8x32xf32>
    %c0_1 = arith.constant 0 : index
    %c0_2 = arith.constant 0 : index
    %c0_3 = arith.constant 0 : index
    %1 = vector.load %arg2[%c0_1, %c0_2, %c0_3] : memref<4x32x32xf32, #tpu.memory_space<vmem>>, vector<1x32x32xf32>
    %2 = vector.shape_cast %1 : vector<1x32x32xf32> to vector<32x32xf32>
    %c0_4 = arith.constant 0 : index
    %c0_5 = arith.constant 0 : index
    %3 = vector.load %arg3[%c0_4, %c0_5] : memref<6x32xf32, #tpu.memory_space<vmem>>, vector<1x32xf32>
    %c1 = arith.constant 1 : index
    %c0_6 = arith.constant 0 : index
    %4 = vector.load %arg3[%c1, %c0_6] : memref<6x32xf32, #tpu.memory_space<vmem>>, vector<1x32xf32>
    %c2 = arith.constant 2 : index
    %c0_7 = arith.constant 0 : index
    %5 = vector.load %arg3[%c2, %c0_7] : memref<6x32xf32, #tpu.memory_space<vmem>>, vector<1x32xf32>
    %cst = arith.constant dense<0.000000e+00> : vector<8x32xf32>
    %6 = tpu.matmul %0, %2, %cst {dimension_numbers = #tpu.dot_dimension_numbers<[1], [0], [0], [1], [0, 0, 1, 1], [], []>} : vector<8x32xf32>, vector<32x32xf32>, vector<8x32xf32> -> vector<8x32xf32>
    %7 = vector.broadcast %3 : vector<1x32xf32> to vector<8x32xf32>
    %8 = arith.addf %6, %7 : vector<8x32xf32>
    %cst_8 = arith.constant dense<0.000000e+00> : vector<8xf32>
    %9 = vector.multi_reduction <add>, %8, %cst_8 [1] : vector<8x32xf32> to vector<8xf32>
    %10 = vector.shape_cast %9 : vector<8xf32> to vector<8x1xf32>
    %cst_9 = arith.constant 3.200000e+01 : f32
    %11 = vector.broadcast %cst_9 : f32 to vector<8x1xf32>
    %12 = arith.divf %10, %11 : vector<8x1xf32>
    %13 = vector.broadcast %12 : vector<8x1xf32> to vector<8x32xf32>
    %14 = arith.subf %8, %13 : vector<8x32xf32>
    %15 = arith.mulf %14, %14 : vector<8x32xf32>
    %cst_10 = arith.constant dense<0.000000e+00> : vector<8xf32>
    %16 = vector.multi_reduction <add>, %15, %cst_10 [1] : vector<8x32xf32> to vector<8xf32>
    %17 = vector.shape_cast %16 : vector<8xf32> to vector<8x1xf32>
    %cst_11 = arith.constant 3.200000e+01 : f32
    %18 = vector.broadcast %cst_11 : f32 to vector<8x1xf32>
    %19 = arith.divf %17, %18 : vector<8x1xf32>
    %20 = vector.broadcast %12 : vector<8x1xf32> to vector<8x32xf32>
    %21 = arith.subf %8, %20 : vector<8x32xf32>
    %cst_12 = arith.constant 9.99999974E-6 : f32
    %22 = vector.broadcast %cst_12 : f32 to vector<8x1xf32>
    %23 = arith.addf %19, %22 : vector<8x1xf32>
    %24 = math.rsqrt %23 : vector<8x1xf32>
    %25 = vector.broadcast %24 : vector<8x1xf32> to vector<8x32xf32>
    %26 = arith.mulf %21, %25 : vector<8x32xf32>
    %27 = vector.broadcast %4 : vector<1x32xf32> to vector<8x32xf32>
    %28 = arith.mulf %26, %27 : vector<8x32xf32>
    %29 = vector.broadcast %5 : vector<1x32xf32> to vector<8x32xf32>
    %30 = arith.addf %28, %29 : vector<8x32xf32>
    %31 = math.tanh %30 : vector<8x32xf32>
    %c1_13 = arith.constant 1 : index
    %c0_14 = arith.constant 0 : index
    %c0_15 = arith.constant 0 : index
    %32 = vector.load %arg2[%c1_13, %c0_14, %c0_15] : memref<4x32x32xf32, #tpu.memory_space<vmem>>, vector<1x32x32xf32>
    %33 = vector.shape_cast %32 : vector<1x32x32xf32> to vector<32x32xf32>
    %c3 = arith.constant 3 : index
    %c0_16 = arith.constant 0 : index
    %34 = vector.load %arg3[%c3, %c0_16] : memref<6x32xf32, #tpu.memory_space<vmem>>, vector<1x32xf32>
    %cst_17 = arith.constant dense<0.000000e+00> : vector<8x32xf32>
    %35 = tpu.matmul %31, %33, %cst_17 {dimension_numbers = #tpu.dot_dimension_numbers<[1], [0], [0], [1], [0, 0, 1, 1], [], []>} : vector<8x32xf32>, vector<32x32xf32>, vector<8x32xf32> -> vector<8x32xf32>
    %36 = vector.broadcast %34 : vector<1x32xf32> to vector<8x32xf32>
    %37 = arith.addf %35, %36 : vector<8x32xf32>
    %cst_18 = arith.constant 0.000000e+00 : f32
    %38 = vector.broadcast %cst_18 : f32 to vector<8x32xf32>
    %39 = arith.maximumf %37, %38 : vector<8x32xf32>
    %c2_19 = arith.constant 2 : index
    %c0_20 = arith.constant 0 : index
    %c0_21 = arith.constant 0 : index
    %40 = vector.load %arg2[%c2_19, %c0_20, %c0_21] : memref<4x32x32xf32, #tpu.memory_space<vmem>>, vector<1x32x32xf32>
    %41 = vector.shape_cast %40 : vector<1x32x32xf32> to vector<32x32xf32>
    %c4 = arith.constant 4 : index
    %c0_22 = arith.constant 0 : index
    %42 = vector.load %arg3[%c4, %c0_22] : memref<6x32xf32, #tpu.memory_space<vmem>>, vector<1x32xf32>
    %cst_23 = arith.constant dense<0.000000e+00> : vector<8x32xf32>
    %43 = tpu.matmul %39, %41, %cst_23 {dimension_numbers = #tpu.dot_dimension_numbers<[1], [0], [0], [1], [0, 0, 1, 1], [], []>} : vector<8x32xf32>, vector<32x32xf32>, vector<8x32xf32> -> vector<8x32xf32>
    %44 = vector.broadcast %42 : vector<1x32xf32> to vector<8x32xf32>
    %45 = arith.addf %43, %44 : vector<8x32xf32>
    %cst_24 = arith.constant 0.000000e+00 : f32
    %46 = vector.broadcast %cst_24 : f32 to vector<8x32xf32>
    %47 = arith.maximumf %45, %46 : vector<8x32xf32>
    %c3_25 = arith.constant 3 : index
    %c0_26 = arith.constant 0 : index
    %c0_27 = arith.constant 0 : index
    %48 = vector.load %arg2[%c3_25, %c0_26, %c0_27] : memref<4x32x32xf32, #tpu.memory_space<vmem>>, vector<1x32x32xf32>
    %49 = vector.shape_cast %48 : vector<1x32x32xf32> to vector<32x32xf32>
    %50 = vector.extract_strided_slice %49 {offsets = [0, 0], sizes = [32, 8], strides = [1, 1]} : vector<32x32xf32> to vector<32x8xf32>
    %c5 = arith.constant 5 : index
    %c0_28 = arith.constant 0 : index
    %51 = vector.load %arg3[%c5, %c0_28] : memref<6x32xf32, #tpu.memory_space<vmem>>, vector<1x8xf32>
    %cst_29 = arith.constant dense<0.000000e+00> : vector<8x8xf32>
    %52 = tpu.matmul %47, %50, %cst_29 {dimension_numbers = #tpu.dot_dimension_numbers<[1], [0], [0], [1], [0, 0, 1, 1], [], []>} : vector<8x32xf32>, vector<32x8xf32>, vector<8x8xf32> -> vector<8x8xf32>
    %53 = vector.broadcast %51 : vector<1x8xf32> to vector<8x8xf32>
    %54 = arith.addf %52, %53 : vector<8x8xf32>
    %55 = vector.extract_strided_slice %54 {offsets = [0, 0], sizes = [8, 4], strides = [1, 1]} : vector<8x8xf32> to vector<8x4xf32>
    %56 = vector.extract_strided_slice %54 {offsets = [0, 4], sizes = [8, 4], strides = [1, 1]} : vector<8x8xf32> to vector<8x4xf32>
    %57 = math.tanh %56 : vector<8x4xf32>
    %cst_30 = arith.constant 1.000000e+00 : f32
    %58 = vector.broadcast %cst_30 : f32 to vector<8x4xf32>
    %59 = arith.addf %57, %58 : vector<8x4xf32>
    %cst_31 = arith.constant 6.000000e+00 : f32
    %60 = vector.broadcast %cst_31 : f32 to vector<8x4xf32>
    %61 = arith.mulf %60, %59 : vector<8x4xf32>
    %cst_32 = arith.constant -1.000000e+01 : f32
    %62 = vector.broadcast %cst_32 : f32 to vector<8x4xf32>
    %63 = arith.addf %62, %61 : vector<8x4xf32>
    %c0_33 = arith.constant 0 : index
    %c0_34 = arith.constant 0 : index
    %64 = vector.load %arg1[%c0_33, %c0_34] : memref<8x4xf32, #tpu.memory_space<vmem>>, vector<8x4xf32>
    %65 = math.exp %63 : vector<8x4xf32>
    %66 = arith.mulf %64, %65 : vector<8x4xf32>
    %67 = arith.addf %55, %66 : vector<8x4xf32>
    %68 = math.tanh %55 : vector<8x4xf32>
    %69 = math.tanh %67 : vector<8x4xf32>
    %cst_35 = arith.constant -5.000000e-01 : f32
    %70 = vector.broadcast %cst_35 : f32 to vector<8x4xf32>
    %71 = arith.mulf %70, %64 : vector<8x4xf32>
    %72 = arith.mulf %71, %64 : vector<8x4xf32>
    %73 = arith.subf %72, %63 : vector<8x4xf32>
    %74 = arith.mulf %69, %69 : vector<8x4xf32>
    %cst_36 = arith.constant 1.000000e+00 : f32
    %75 = vector.broadcast %cst_36 : f32 to vector<8x4xf32>
    %76 = arith.subf %75, %74 : vector<8x4xf32>
    %cst_37 = arith.constant 0.000000e+00 : f32
    %77 = vector.broadcast %cst_37 : f32 to vector<8x4xf32>
    %78 = arith.maximumf %76, %77 : vector<8x4xf32>
    %cst_38 = arith.constant 9.99999997E-7 : f32
    %79 = vector.broadcast %cst_38 : f32 to vector<8x4xf32>
    %80 = arith.addf %78, %79 : vector<8x4xf32>
    %81 = math.log %80 : vector<8x4xf32>
    %82 = arith.subf %73, %81 : vector<8x4xf32>
    %cst_39 = arith.constant dense<0.000000e+00> : vector<8xf32>
    %83 = vector.multi_reduction <add>, %82, %cst_39 [1] : vector<8x4xf32> to vector<8xf32>
    %84 = vector.shape_cast %83 : vector<8xf32> to vector<8x1xf32>
    %cst_40 = arith.constant 3.67575407 : f32
    %85 = vector.broadcast %cst_40 : f32 to vector<8x1xf32>
    %86 = arith.subf %84, %85 : vector<8x1xf32>
    %cst_41 = arith.constant 1.000000e+00 : f32
    %87 = vector.broadcast %cst_41 : f32 to vector<8x4xf32>
    %88 = arith.mulf %87, %68 : vector<8x4xf32>
    %cst_42 = arith.constant 1.000000e+00 : f32
    %89 = vector.broadcast %cst_42 : f32 to vector<8x4xf32>
    %90 = arith.cmpf oeq, %88, %89 : vector<8x4xf32>
    %cst_43 = arith.constant 1.000000e-10 : f32
    %91 = vector.broadcast %cst_43 : f32 to vector<8x4xf32>
    %92 = arith.subf %88, %91 : vector<8x4xf32>
    %93 = arith.select %90, %92, %88 : vector<8x4xi1>, vector<8x4xf32>
    %cst_44 = arith.constant -1.000000e+00 : f32
    %94 = vector.broadcast %cst_44 : f32 to vector<8x4xf32>
    %95 = arith.cmpf oeq, %93, %94 : vector<8x4xf32>
    %cst_45 = arith.constant 1.000000e-10 : f32
    %96 = vector.broadcast %cst_45 : f32 to vector<8x4xf32>
    %97 = arith.addf %93, %96 : vector<8x4xf32>
    %98 = arith.select %95, %97, %93 : vector<8x4xi1>, vector<8x4xf32>
    %c0_46 = arith.constant 0 : index
    %c0_47 = arith.constant 0 : index
    %99 = vector.load %arg4[%c0_46, %c0_47] : memref<8x13xf32, #tpu.memory_space<vmem>>, vector<8x4xf32>
    tpu.vector_store %arg4[%c0_46, %c0_47], %98 {strides = array<i32>} : memref<8x13xf32, #tpu.memory_space<vmem>>, vector<8x4xf32>,
    %cst_48 = arith.constant 1.000000e+00 : f32
    %100 = vector.broadcast %cst_48 : f32 to vector<8x4xf32>
    %101 = arith.mulf %100, %69 : vector<8x4xf32>
    %cst_49 = arith.constant 1.000000e+00 : f32
    %102 = vector.broadcast %cst_49 : f32 to vector<8x4xf32>
    %103 = arith.cmpf oeq, %101, %102 : vector<8x4xf32>
    %cst_50 = arith.constant 1.000000e-10 : f32
    %104 = vector.broadcast %cst_50 : f32 to vector<8x4xf32>
    %105 = arith.subf %101, %104 : vector<8x4xf32>
    %106 = arith.select %103, %105, %101 : vector<8x4xi1>, vector<8x4xf32>
    %cst_51 = arith.constant -1.000000e+00 : f32
    %107 = vector.broadcast %cst_51 : f32 to vector<8x4xf32>
    %108 = arith.cmpf oeq, %106, %107 : vector<8x4xf32>
    %cst_52 = arith.constant 1.000000e-10 : f32
    %109 = vector.broadcast %cst_52 : f32 to vector<8x4xf32>
    %110 = arith.addf %106, %109 : vector<8x4xf32>
    %111 = arith.select %108, %110, %106 : vector<8x4xi1>, vector<8x4xf32>
    %c0_53 = arith.constant 0 : index
    %c4_54 = arith.constant 4 : index
    %112 = vector.load %arg4[%c0_53, %c4_54] : memref<8x13xf32, #tpu.memory_space<vmem>>, vector<8x4xf32>
    tpu.vector_store %arg4[%c0_53, %c4_54], %111 {strides = array<i32>} : memref<8x13xf32, #tpu.memory_space<vmem>>, vector<8x4xf32>,
    %c0_55 = arith.constant 0 : index
    %c8 = arith.constant 8 : index
    %113 = vector.load %arg4[%c0_55, %c8] : memref<8x13xf32, #tpu.memory_space<vmem>>, vector<8x4xf32>
    tpu.vector_store %arg4[%c0_55, %c8], %63 {strides = array<i32>} : memref<8x13xf32, #tpu.memory_space<vmem>>, vector<8x4xf32>,
    %c0_56 = arith.constant 0 : index
    %c12 = arith.constant 12 : index
    %114 = vector.load %arg4[%c0_56, %c12] : memref<8x13xf32, #tpu.memory_space<vmem>>, vector<8x1xf32>
    tpu.vector_store %arg4[%c0_56, %c12], %86 {strides = array<i32>} : memref<8x13xf32, #tpu.memory_space<vmem>>, vector<8x1xf32>,
    return
  }
}

</mosaic_0001>

<llo_original>
// kernel: tpu_custom_call.1
$region0: #{tpu_custom_call.1}
  #allocation0 [shape = 'u32[]', space=smem, size = 0x4, offset = 0x4, fixed_abs, tag = 'smem constant byte address 0x4 - core index']
  #allocation1 [shape = 'u32[144,128]{1,0:T(1,128)}', space=vmem, size = 0x12000, scoped, tag = 'internal scratch']
  %s0 = inlined_call_operand.vmem [shape: f32[8,32], index: 0, kind: input, shape index: {}]
  %s1 = inlined_call_operand.vmem [shape: f32[8,4], index: 1, kind: input, shape index: {}]
  %s2 = inlined_call_operand.hbm [shape: f32[4,32,32], index: 2, kind: input, shape index: {}]
  %s3 = inlined_call_operand.vmem [shape: f32[6,32], index: 3, kind: input, shape index: {}]
  %s4 = inlined_call_operand.hbm [shape: f32[8,13], index: 4, kind: output, shape index: {}]
  %s5 = sld [smem:[#allocation0]]
  $region30: #{tpu_custom_call.1} parent=0
    _
  %s7 = ssub.s32 1, %s5
  %s8 = scalar_select 0, %s7, %s5
  $region1: #{tpu_custom_call.1} parent=0
    #allocation2 [shape = 'u8[65536]{0}', space=vmem, size = 0x10000, scoped, tag = 'input window, operand 2, single buffered']
    #allocation3 [shape = 's32[1]{0}', space=sflag, size = 0x4, scoped, tag = 'scoped memory for tpu_custom_call.1']
    #allocation4 [shape = 's32[1]{0}', space=sflag, size = 0x4, scoped, tag = 'scoped memory for tpu_custom_call.1']
    #allocation5 [shape = 'u8[4096]{0}', space=vmem, size = 0x1000, scoped, tag = 'output window, operand 0, single buffered']
    %9 = vsyncpa [#allocation3], 0
    %10 = vsyncpa [#allocation4], 0
    // Predicated region
    $region2: #{tpu_custom_call.1} parent=1 // pred_check
      _
    $region3: #{tpu_custom_call.1} parent=1 // pred_check_branch
      %12 = sbr.rel (0) target = $region5
    $region4: #{tpu_custom_call.1} parent=1 // pred_region
      _
    $region5: #{tpu_custom_call.1} parent=1 // pred_fallthru
      _
    // Predicated region
    $region6: #{tpu_custom_call.1} parent=1 // pred_check
      _
    $region7: #{tpu_custom_call.1} parent=1 // pred_check_branch
      %14 = sbr.rel (0) target = $region9
    $region8: #{tpu_custom_call.1} parent=1 // pred_region
      _
    $region9: #{tpu_custom_call.1} parent=1 // pred_fallthru
      _
    // Predicated region
    $region10: #{tpu_custom_call.1} parent=1 // pred_check
      _
    $region11: #{tpu_custom_call.1} parent=1 // pred_check_branch
      %16 = sbr.rel (0) target = $region13
    $region12: #{tpu_custom_call.1} parent=1 // pred_region
      %s18 = ssub.s32 2048, 2048
      %19 = vsyncadd [#allocation3], %s18
      %s20 = sshll.u32 [#allocation2], 4
      %s21 = int_to_ptr.vmem [resolvable:$true] %s20
      %26 = dma.hbm_to_vmem [thread:$0]  %s2, 2048, %s21, [#allocation3], 128, 128, 8
    $region13: #{tpu_custom_call.1} parent=1 // pred_fallthru
      _
    // Predicated region
    $region14: #{tpu_custom_call.1} parent=1 // pred_check
      _
    $region15: #{tpu_custom_call.1} parent=1 // pred_check_branch
      %28 = sbr.rel (0) target = $region17
    $region16: #{tpu_custom_call.1} parent=1 // pred_region
      _
    $region17: #{tpu_custom_call.1} parent=1 // pred_fallthru
      _
    // Predicated region
    $region18: #{tpu_custom_call.1} parent=1 // pred_check
      _
    $region19: #{tpu_custom_call.1} parent=1 // pred_check_branch
      %30 = sbr.rel (0) target = $region21
    $region20: #{tpu_custom_call.1} parent=1 // pred_region
      %31 = dma.done [#allocation3], 2048
    $region21: #{tpu_custom_call.1} parent=1 // pred_fallthru
      _
    %v32 = vld [vmem:[%s0] sm:$0xff]
    %v33 = vld [vmem:[#allocation2] sm:$0xff]
    %v34 = vld [vmem:[#allocation2 + $0x8] sm:$0xff]
    %v35 = vld [vmem:[#allocation2 + $0x10] sm:$0xff]
    %v36 = vld [vmem:[#allocation2 + $0x18] sm:$0xff]
    %v37 = vld [vmem:[%s3] sm:$0x1]
    %v38 = vld [vmem:[%s3 + $0x1] sm:$0x1]
    %v39 = vld [vmem:[%s3 + $0x2] sm:$0x1]
    %v40 = vlaneseq
    %v41 = vshrl.u32 %v40, 7
    %v42 = vsub.s32 0, %v41
    %v43 = vrot.slane %v37, %v42
    %vm44 = vcmask 261120
    %v46 = vsel %vm44, %v32, 0
    %48 = vmatprep.subr.mxu0 0.0
    %49 = vmatpush1.msra.mxu0 0.0
    %50 = vmatprep.subr.mxu0 0.0
    %51 = vmatpush1.msra.mxu0 0.0
    %52 = vmatprep.subr.mxu0 0.0
    %53 = vmatpush1.msra.mxu0 0.0
    %54 = vmatprep.subr.mxu0 0.0
    %55 = vmatpush1.msra.mxu0 0.0
    %56 = vmatprep.subr.mxu0 0.0
    %57 = vmatpush1.msra.mxu0 0.0
    %58 = vmatprep.subr.mxu0 0.0
    %59 = vmatpush1.msra.mxu0 0.0
    %60 = vmatprep.subr.mxu0 0.0
    %61 = vmatpush1.msra.mxu0 0.0
    %62 = vmatprep.subr.mxu0 0.0
    %63 = vmatpush1.msra.mxu0 0.0
    %64 = vmatprep.subr.mxu0 0.0
    %65 = vmatpush1.msra.mxu0 0.0
    %66 = vmatprep.subr.mxu0 0.0
    %67 = vmatpush1.msra.mxu0 0.0
    %68 = vmatprep.subr.mxu0 0.0
    %69 = vmatpush1.msra.mxu0 0.0
    %70 = vmatprep.subr.mxu0 0.0
    %71 = vmatpush1.msra.mxu0 0.0
    %72 = vmatprep.subr.mxu0 0.0
    %73 = vmatpush1.msra.mxu0 %v36
    %74 = vmatprep.subr.mxu0 0.0
    %75 = vmatpush1.msra.mxu0 %v35
    %76 = vmatprep.subr.mxu0 0.0
    %77 = vmatpush1.msra.mxu0 %v34
    %78 = vmatprep.subr.mxu0 0.0
    %79 = vmatpush1.msra.mxu0 %v33
    %80 = vmatprep.subr.mxu0 0.0
    %81 = vmatpush2.msra.mxu0 0.0
    %82 = vmatprep.subr.mxu0 0.0
    %83 = vmatpush2.msra.mxu0 0.0
    %84 = vmatprep.subr.mxu0 0.0
    %85 = vmatpush2.msra.mxu0 0.0
    %86 = vmatprep.subr.mxu0 0.0
    %87 = vmatpush2.msra.mxu0 0.0
    %88 = vmatprep.subr.mxu0 0.0
    %89 = vmatpush2.msra.mxu0 0.0
    %90 = vmatprep.subr.mxu0 0.0
    %91 = vmatpush2.msra.mxu0 0.0
    %92 = vmatprep.subr.mxu0 0.0
    %93 = vmatpush2.msra.mxu0 0.0
    %94 = vmatprep.subr.mxu0 0.0
    %95 = vmatpush2.msra.mxu0 0.0
    %96 = vmatprep.subr.mxu0 0.0
    %97 = vmatpush2.msra.mxu0 0.0
    %98 = vmatprep.subr.mxu0 0.0
    %99 = vmatpush2.msra.mxu0 0.0
    %100 = vmatprep.subr.mxu0 0.0
    %101 = vmatpush2.msra.mxu0 0.0
    %102 = vmatprep.subr.mxu0 0.0
    %103 = vmatpush2.msra.mxu0 0.0
    %104 = vmatprep.subr.mxu0 0.0
    %105 = vmatpush2.msra.mxu0 0.0
    %106 = vmatprep.subr.mxu0 0.0
    %107 = vmatpush2.msra.mxu0 0.0
    %108 = vmatprep.subr.mxu0 0.0
    %109 = vmatpush2.msra.mxu0 0.0
    %110 = vmatprep.subr.mxu0 0.0
    %111 = vmatpush2.msra.mxu0 0.0
    %112 = vmatprep.mubr.f32.mxu0 0.0
    %113 = vmatmul.mubr.f32.gmra.mxu0 %v46
    %v114 = vpop.f32.mrf.mxu0
    %v115 = vadd.f32 %v43, %v114
    %v116 = vpop.f32.mrf.mxu0
    %117 = vdwg.mxu0
    %v118 = vsel %vm44, %v115, 0.0
    %119 = vadd.xlane.f32.xlu0 %v118
    %v120 = vpop.xlane.xlu0 %119
    %v121 = vrcp.pop 32.0
    %v122 = vmul.f32 %v120, %v121
    %v123 = vsub.f32 %v115, %v122
    %v124 = vmul.f32 %v123, %v123
    %v125 = vsel %vm44, %v124, 0.0
    %126 = vadd.xlane.f32.xlu0 %v125
    %v127 = vpop.xlane.xlu0 %126
    %v128 = vmul.f32 %v127, %v121
    %v129 = vadd.f32 %v128, 1e-05
    %v130 = vrsqrt.pop %v129
    %v131 = vmul.f32 %v123, %v130
    %v132 = vlaneseq
    %v133 = vshrl.u32 %v132, 7
    %v134 = vsub.s32 0, %v133
    %v135 = vrot.slane %v38, %v134
    %v136 = vmul.f32 %v131, %v135
    %v137 = vlaneseq
    %v138 = vshrl.u32 %v137, 7
    %v139 = vsub.s32 0, %v138
    %v140 = vrot.slane %v39, %v139
    %v141 = vadd.f32 %v136, %v140
    %v142 = vtanh.pop %v141
    %s143 = scalar_lea.vmem [#allocation2], 32
    %v144 = vld [vmem:[%s143] sm:$0xff]
    %v145 = vld [vmem:[%s143 + $0x8] sm:$0xff]
    %v146 = vld [vmem:[%s143 + $0x10] sm:$0xff]
    %v147 = vld [vmem:[%s143 + $0x18] sm:$0xff]
    %v148 = vld [vmem:[%s3 + $0x3] sm:$0x1]
    %v149 = vlaneseq
    %v150 = vshrl.u32 %v149, 7
    %v151 = vsub.s32 0, %v150
    %v152 = vrot.slane %v148, %v151
    %v154 = vsel %vm44, %v142, 0
    %156 = vmatprep.subr.mxu0 0.0
    %157 = vmatpush1.msra.mxu0 0.0
    %158 = vmatprep.subr.mxu0 0.0
    %159 = vmatpush1.msra.mxu0 0.0
    %160 = vmatprep.subr.mxu0 0.0
    %161 = vmatpush1.msra.mxu0 0.0
    %162 = vmatprep.subr.mxu0 0.0
    %163 = vmatpush1.msra.mxu0 0.0
    %164 = vmatprep.subr.mxu0 0.0
    %165 = vmatpush1.msra.mxu0 0.0
    %166 = vmatprep.subr.mxu0 0.0
    %167 = vmatpush1.msra.mxu0 0.0
    %168 = vmatprep.subr.mxu0 0.0
    %169 = vmatpush1.msra.mxu0 0.0
    %170 = vmatprep.subr.mxu0 0.0
    %171 = vmatpush1.msra.mxu0 0.0
    %172 = vmatprep.subr.mxu0 0.0
    %173 = vmatpush1.msra.mxu0 0.0
    %174 = vmatprep.subr.mxu0 0.0
    %175 = vmatpush1.msra.mxu0 0.0
    %176 = vmatprep.subr.mxu0 0.0
    %177 = vmatpush1.msra.mxu0 0.0
    %178 = vmatprep.subr.mxu0 0.0
    %179 = vmatpush1.msra.mxu0 0.0
    %180 = vmatprep.subr.mxu0 0.0
    %181 = vmatpush1.msra.mxu0 %v147
    %182 = vmatprep.subr.mxu0 0.0
    %183 = vmatpush1.msra.mxu0 %v146
    %184 = vmatprep.subr.mxu0 0.0
    %185 = vmatpush1.msra.mxu0 %v145
    %186 = vmatprep.subr.mxu0 0.0
    %187 = vmatpush1.msra.mxu0 %v144
    %188 = vmatprep.subr.mxu0 0.0
    %189 = vmatpush2.msra.mxu0 0.0
    %190 = vmatprep.subr.mxu0 0.0
    %191 = vmatpush2.msra.mxu0 0.0
    %192 = vmatprep.subr.mxu0 0.0
    %193 = vmatpush2.msra.mxu0 0.0
    %194 = vmatprep.subr.mxu0 0.0
    %195 = vmatpush2.msra.mxu0 0.0
    %196 = vmatprep.subr.mxu0 0.0
    %197 = vmatpush2.msra.mxu0 0.0
    %198 = vmatprep.subr.mxu0 0.0
    %199 = vmatpush2.msra.mxu0 0.0
    %200 = vmatprep.subr.mxu0 0.0
    %201 = vmatpush2.msra.mxu0 0.0
    %202 = vmatprep.subr.mxu0 0.0
    %203 = vmatpush2.msra.mxu0 0.0
    %204 = vmatprep.subr.mxu0 0.0
    %205 = vmatpush2.msra.mxu0 0.0
    %206 = vmatprep.subr.mxu0 0.0
    %207 = vmatpush2.msra.mxu0 0.0
    %208 = vmatprep.subr.mxu0 0.0
    %209 = vmatpush2.msra.mxu0 0.0
    %210 = vmatprep.subr.mxu0 0.0
    %211 = vmatpush2.msra.mxu0 0.0
    %212 = vmatprep.subr.mxu0 0.0
    %213 = vmatpush2.msra.mxu0 0.0
    %214 = vmatprep.subr.mxu0 0.0
    %215 = vmatpush2.msra.mxu0 0.0
    %216 = vmatprep.subr.mxu0 0.0
    %217 = vmatpush2.msra.mxu0 0.0
    %218 = vmatprep.subr.mxu0 0.0
    %219 = vmatpush2.msra.mxu0 0.0
    %220 = vmatprep.mubr.f32.mxu0 0.0
    %221 = vmatmul.mubr.f32.gmra.mxu0 %v154
    %v222 = vpop.f32.mrf.mxu0
    %v223 = vadd.f32 %v152, %v222
    %v224 = vpop.f32.mrf.mxu0
    %225 = vdwg.mxu0
    %v226 = vmax.f32 %v223, 0.0
    %s227 = scalar_lea.vmem [#allocation2], 64
    %v228 = vld [vmem:[%s227] sm:$0xff]
    %v229 = vld [vmem:[%s227 + $0x8] sm:$0xff]
    %v230 = vld [vmem:[%s227 + $0x10] sm:$0xff]
    %v231 = vld [vmem:[%s227 + $0x18] sm:$0xff]
    %v232 = vld [vmem:[%s3 + $0x4] sm:$0x1]
    %v233 = vlaneseq
    %v234 = vshrl.u32 %v233, 7
    %v235 = vsub.s32 0, %v234
    %v236 = vrot.slane %v232, %v235
    %v238 = vsel %vm44, %v226, 0
    %240 = vmatprep.subr.mxu0 0.0
    %241 = vmatpush1.msra.mxu0 0.0
    %242 = vmatprep.subr.mxu0 0.0
    %243 = vmatpush1.msra.mxu0 0.0
    %244 = vmatprep.subr.mxu0 0.0
    %245 = vmatpush1.msra.mxu0 0.0
    %246 = vmatprep.subr.mxu0 0.0
    %247 = vmatpush1.msra.mxu0 0.0
    %248 = vmatprep.subr.mxu0 0.0
    %249 = vmatpush1.msra.mxu0 0.0
    %250 = vmatprep.subr.mxu0 0.0
    %251 = vmatpush1.msra.mxu0 0.0
    %252 = vmatprep.subr.mxu0 0.0
    %253 = vmatpush1.msra.mxu0 0.0
    %254 = vmatprep.subr.mxu0 0.0
    %255 = vmatpush1.msra.mxu0 0.0
    %256 = vmatprep.subr.mxu0 0.0
    %257 = vmatpush1.msra.mxu0 0.0
    %258 = vmatprep.subr.mxu0 0.0
    %259 = vmatpush1.msra.mxu0 0.0
    %260 = vmatprep.subr.mxu0 0.0
    %261 = vmatpush1.msra.mxu0 0.0
    %262 = vmatprep.subr.mxu0 0.0
    %263 = vmatpush1.msra.mxu0 0.0
    %264 = vmatprep.subr.mxu0 0.0
    %265 = vmatpush1.msra.mxu0 %v231
    %266 = vmatprep.subr.mxu0 0.0
    %267 = vmatpush1.msra.mxu0 %v230
    %268 = vmatprep.subr.mxu0 0.0
    %269 = vmatpush1.msra.mxu0 %v229
    %270 = vmatprep.subr.mxu0 0.0
    %271 = vmatpush1.msra.mxu0 %v228
    %272 = vmatprep.subr.mxu0 0.0
    %273 = vmatpush2.msra.mxu0 0.0
    %274 = vmatprep.subr.mxu0 0.0
    %275 = vmatpush2.msra.mxu0 0.0
    %276 = vmatprep.subr.mxu0 0.0
    %277 = vmatpush2.msra.mxu0 0.0
    %278 = vmatprep.subr.mxu0 0.0
    %279 = vmatpush2.msra.mxu0 0.0
    %280 = vmatprep.subr.mxu0 0.0
    %281 = vmatpush2.msra.mxu0 0.0
    %282 = vmatprep.subr.mxu0 0.0
    %283 = vmatpush2.msra.mxu0 0.0
    %284 = vmatprep.subr.mxu0 0.0
    %285 = vmatpush2.msra.mxu0 0.0
    %286 = vmatprep.subr.mxu0 0.0
    %287 = vmatpush2.msra.mxu0 0.0
    %288 = vmatprep.subr.mxu0 0.0
    %289 = vmatpush2.msra.mxu0 0.0
    %290 = vmatprep.subr.mxu0 0.0
    %291 = vmatpush2.msra.mxu0 0.0
    %292 = vmatprep.subr.mxu0 0.0
    %293 = vmatpush2.msra.mxu0 0.0
    %294 = vmatprep.subr.mxu0 0.0
    %295 = vmatpush2.msra.mxu0 0.0
    %296 = vmatprep.subr.mxu0 0.0
    %297 = vmatpush2.msra.mxu0 0.0
    %298 = vmatprep.subr.mxu0 0.0
    %299 = vmatpush2.msra.mxu0 0.0
    %300 = vmatprep.subr.mxu0 0.0
    %301 = vmatpush2.msra.mxu0 0.0
    %302 = vmatprep.subr.mxu0 0.0
    %303 = vmatpush2.msra.mxu0 0.0
    %304 = vmatprep.mubr.f32.mxu0 0.0
    %305 = vmatmul.mubr.f32.gmra.mxu0 %v238
    %v306 = vpop.f32.mrf.mxu0
    %v307 = vadd.f32 %v236, %v306
    %v308 = vpop.f32.mrf.mxu0
    %309 = vdwg.mxu0
    %v310 = vmax.f32 %v307, 0.0
    %s311 = scalar_lea.vmem [#allocation2], 96
    %v312 = vld [vmem:[%s311] sm:$0xff]
    %v313 = vld [vmem:[%s311 + $0x8] sm:$0xff]
    %v314 = vld [vmem:[%s311 + $0x10] sm:$0xff]
    %v315 = vld [vmem:[%s311 + $0x18] sm:$0xff]
    %v316 = vld [vmem:[%s3 + $0x5] sm:$0x1]
    %v317 = vlaneseq
    %v318 = vshrl.u32 %v317, 7
    %v319 = vsub.s32 0, %v318
    %v320 = vrot.slane %v316, %v319
    %v322 = vsel %vm44, %v310, 0
    %324 = vmatprep.subr.mxu0 0.0
    %325 = vmatpush1.msra.mxu0 0.0
    %326 = vmatprep.subr.mxu0 0.0
    %327 = vmatpush1.msra.mxu0 0.0
    %328 = vmatprep.subr.mxu0 0.0
    %329 = vmatpush1.msra.mxu0 0.0
    %330 = vmatprep.subr.mxu0 0.0
    %331 = vmatpush1.msra.mxu0 0.0
    %332 = vmatprep.subr.mxu0 0.0
    %333 = vmatpush1.msra.mxu0 0.0
    %334 = vmatprep.subr.mxu0 0.0
    %335 = vmatpush1.msra.mxu0 0.0
    %336 = vmatprep.subr.mxu0 0.0
    %337 = vmatpush1.msra.mxu0 0.0
    %338 = vmatprep.subr.mxu0 0.0
    %339 = vmatpush1.msra.mxu0 0.0
    %340 = vmatprep.subr.mxu0 0.0
    %341 = vmatpush1.msra.mxu0 0.0
    %342 = vmatprep.subr.mxu0 0.0
    %343 = vmatpush1.msra.mxu0 0.0
    %344 = vmatprep.subr.mxu0 0.0
    %345 = vmatpush1.msra.mxu0 0.0
    %346 = vmatprep.subr.mxu0 0.0
    %347 = vmatpush1.msra.mxu0 0.0
    %348 = vmatprep.subr.mxu0 0.0
    %349 = vmatpush1.msra.mxu0 %v315
    %350 = vmatprep.subr.mxu0 0.0
    %351 = vmatpush1.msra.mxu0 %v314
    %352 = vmatprep.subr.mxu0 0.0
    %353 = vmatpush1.msra.mxu0 %v313
    %354 = vmatprep.subr.mxu0 0.0
    %355 = vmatpush1.msra.mxu0 %v312
    %356 = vmatprep.subr.mxu0 0.0
    %357 = vmatpush2.msra.mxu0 0.0
    %358 = vmatprep.subr.mxu0 0.0
    %359 = vmatpush2.msra.mxu0 0.0
    %360 = vmatprep.subr.mxu0 0.0
    %361 = vmatpush2.msra.mxu0 0.0
    %362 = vmatprep.subr.mxu0 0.0
    %363 = vmatpush2.msra.mxu0 0.0
    %364 = vmatprep.subr.mxu0 0.0
    %365 = vmatpush2.msra.mxu0 0.0
    %366 = vmatprep.subr.mxu0 0.0
    %367 = vmatpush2.msra.mxu0 0.0
    %368 = vmatprep.subr.mxu0 0.0
    %369 = vmatpush2.msra.mxu0 0.0
    %370 = vmatprep.subr.mxu0 0.0
    %371 = vmatpush2.msra.mxu0 0.0
    %372 = vmatprep.subr.mxu0 0.0
    %373 = vmatpush2.msra.mxu0 0.0
    %374 = vmatprep.subr.mxu0 0.0
    %375 = vmatpush2.msra.mxu0 0.0
    %376 = vmatprep.subr.mxu0 0.0
    %377 = vmatpush2.msra.mxu0 0.0
    %378 = vmatprep.subr.mxu0 0.0
    %379 = vmatpush2.msra.mxu0 0.0
    %380 = vmatprep.subr.mxu0 0.0
    %381 = vmatpush2.msra.mxu0 0.0
    %382 = vmatprep.subr.mxu0 0.0
    %383 = vmatpush2.msra.mxu0 0.0
    %384 = vmatprep.subr.mxu0 0.0
    %385 = vmatpush2.msra.mxu0 0.0
    %386 = vmatprep.subr.mxu0 0.0
    %387 = vmatpush2.msra.mxu0 0.0
    %388 = vmatprep.mubr.f32.mxu0 0.0
    %389 = vmatmul.mubr.f32.gmra.mxu0 %v322
    %v390 = vpop.f32.mrf.mxu0
    %v391 = vadd.f32 %v320, %v390
    %v392 = vpop.f32.mrf.mxu0
    %393 = vdwg.mxu0
    %v394 = vtanh.pop %v391
    %v395 = vadd.f32 %v394, 1.0
    %v396 = vmul.f32 %v395, 6.0
    %v397 = vadd.f32 %v396, -10.0
    %v398 = vld [vmem:[%s1] sm:$0xff]
    %v399 = vmul.f32 %v397, 1.442695
    %v400 = vpow.pop %v399
    %402 = vrot.lane.b32.xlu0 %v400, 124
    %v403 = vpop.permute.xlu0 %402
    %v405 = vmul.f32 %v398, %v403
    %v406 = vadd.f32 %v391, %v405
    %v407 = vtanh.pop %v406
    %v408 = vmul.f32 %v398, -0.5
    %v409 = vmul.f32 %v408, %v398
    %411 = vrot.lane.b32.xlu0 %v397, 124
    %v412 = vpop.permute.xlu0 %411
    %v414 = vsub.f32 %v409, %v412
    %v415 = vmul.f32 %v407, %v407
    %v416 = vsub.f32 1.0, %v415
    %v417 = vmax.f32 %v416, 0.0
    %v418 = vadd.f32 %v417, 1e-06
    %v419 = vlog2.pop %v418
    %v420 = vmul.f32 %v419, 0.6931472
    %v421 = vsub.f32 %v414, %v420
    %vm422 = vcmask 31744
    %v423 = vsel %vm422, %v421, 0.0
    %424 = vadd.xlane.f32.xlu0 %v423
    %v425 = vpop.xlane.xlu0 %424
    %v426 = vsub.f32 %v425, 3.675754
    %vm427 = vcmp.eq.f32.partialorder %v394, 1.0
    %v428 = vsub.f32 %v394, 1e-10
    %v429 = vsel %vm427, %v428, %v394
    %vm430 = vcmp.eq.f32.partialorder %v429, -1.0
    %v431 = vadd.f32 %v429, 1e-10
    %v432 = vsel %vm430, %v431, %v429
    %433 = vst.msk [vmem:[#allocation5] sm:$0xff] %vm422, %v432
    %vm434 = vcmp.eq.f32.partialorder %v407, 1.0
    %v435 = vsub.f32 %v407, 1e-10
    %v436 = vsel %vm434, %v435, %v407
    %vm437 = vcmp.eq.f32.partialorder %v436, -1.0
    %v438 = vadd.f32 %v436, 1e-10
    %v439 = vsel %vm437, %v438, %v436
    %441 = vrot.lane.b32.xlu0 %v439, 4
    %v442 = vpop.permute.xlu0 %441
    %vm444 = vcmask 64544
    %445 = vst.msk [vmem:[#allocation5] sm:$0xff] %vm444, %v442
    %446 = vrot.lane.b32.xlu0 %v397, 4
    %v447 = vpop.permute.xlu0 %446
    %vm449 = vcmask 97344
    %450 = vst.msk [vmem:[#allocation5] sm:$0xff] %vm449, %v447
    %vm451 = vcmask 105568
    %452 = vst.msk [vmem:[#allocation5] sm:$0xff] %vm451, %v426
    // Predicated region
    $region22: #{tpu_custom_call.1} parent=1 // pred_check
      _
    $region23: #{tpu_custom_call.1} parent=1 // pred_check_branch
      %454 = sbr.rel (0) target = $region25
    $region24: #{tpu_custom_call.1} parent=1 // pred_region
      %s456 = ssub.s32 128, 128
      %457 = vsyncadd [#allocation4], %s456
      %s459 = sshll.u32 [#allocation5], 4
      %s460 = int_to_ptr.vmem [resolvable:$true] %s459
      %462 = dma.vmem_to_hbm [thread:$0]  %s460, 128, %s4, [#allocation4]
    $region25: #{tpu_custom_call.1} parent=1 // pred_fallthru
      _
    // Predicated region
    $region26: #{tpu_custom_call.1} parent=1 // pred_check
      _
    $region27: #{tpu_custom_call.1} parent=1 // pred_check_branch
      %464 = sbr.rel (0) target = $region29
    $region28: #{tpu_custom_call.1} parent=1 // pred_region
      %465 = dma.done [#allocation4], 128
    $region29: #{tpu_custom_call.1} parent=1 // pred_fallthru
      _
    %466 = vsyncpa [#allocation3], 1
    %467 = vsyncpa [#allocation4], 1

</llo_original>
